<compile_context>
chip_gen: v7x
topology: tpu7x:2x2x1
jax: 0.10.0
libtpu: 0.0.40
codegen_flags: <defaults>
</compile_context>

<pallas_src>
import functools

import jax
import jax.numpy as jnp
from jax import lax
from jax.experimental import pallas as pl
from jax.experimental.pallas import tpu as pltpu

S_SCALE = 64.0      # self.s in the PyTorch module
EMA_DECAY = 0.99    # self.m = 0.99 * m + (1 - 0.99) * self.m
NEG_BIG = -1e9      # finite "-inf" for masked columns (S_SCALE * 1e9 stays finite in f32)
NORM_EPS = 1e-12    # guards rsqrt(0) on zero-padded rows


def _round_up(x, m):
    return (x + m - 1) // m * m


def _choose_tiles(b):
    """(Bp, TR): padded batch and row-tile size.

    bf16 packs 16 rows per vreg, so Bp is a multiple of 16.  For large batches
    use 256-row tiles (full 256x256 MXU on v6e/v7x, bounded VMEM per tile)."""
    if b <= 256:
        bp = _round_up(max(b, 16), 16)
        return bp, bp
    tr = 256
    return _round_up(b, tr), tr


def _vmem_capacity_bytes():
    """Generation-aware VMEM capacity (v7x: 64 MiB/TC, v5e/v6e: 128 MiB)."""
    try:
        return int(pltpu.get_tpu_info().vmem_capacity_bytes)
    except Exception:
        return 64 << 20  # conservative fallback that is safe on every generation


def _stats_kernel(f1_ref, f2_ref, labr_ref, labc_ref,
                  pos_ref, offmax_ref, sumexp_ref, *, b_actual):
    """Per row-tile: pos (diag cos), off-diag max, off-diag sum-exp (shifted)."""
    tr = f1_ref.shape[0]
    bp = f2_ref.shape[0]

    # bf16 on the wire; f32 only for the norm statistic (rsqrt -> EUP slot).
    f1 = f1_ref[...].astype(jnp.float32)                       # [TR, Dp]
    f2 = f2_ref[...].astype(jnp.float32)                       # [Bp, Dp]
    inv1 = lax.rsqrt(jnp.maximum(jnp.sum(f1 * f1, axis=1, keepdims=True), NORM_EPS))
    inv2 = lax.rsqrt(jnp.maximum(jnp.sum(f2 * f2, axis=1, keepdims=True), NORM_EPS))
    f1n = (f1 * inv1).astype(jnp.bfloat16)
    f2n = (f2 * inv2).astype(jnp.bfloat16)

    # cos_theta tile on the MXU (bf16 operands, f32 accumulate), clamp as in ref.
    cos = lax.dot_general(
        f1n, f2n, dimension_numbers=(((1,), (1,)), ((), ())),
        preferred_element_type=jnp.float32)                    # [TR, Bp]
    cos = jnp.clip(cos, -1.0, 1.0)

    # Thin-iota broadcast masks (no [TR,Bp] int32 iotas).
    row_ids = pl.program_id(0) * tr + lax.broadcasted_iota(jnp.int32, (tr, 1), 0)
    col_ids = lax.broadcasted_iota(jnp.int32, (1, bp), 1)
    diag = row_ids == col_ids                                   # [TR, Bp]
    off_ok = jnp.logical_and(col_ids < b_actual, jnp.logical_not(diag))

    # Same-label off-diagonal zeroing (the PyTorch unique/scatter loop).
    same_label = labr_ref[...] == labc_ref[...]                 # [TR, Bp]
    cosm = jnp.where(jnp.logical_and(same_label, off_ok), 0.0, cos)

    # Diagonal (target) cosine.
    pos_ref[...] = jnp.sum(jnp.where(diag, cosm, 0.0), axis=1, keepdims=True)

    # Off-diagonal statistics: max, and sum-exp of S*cos shifted by the max.
    off = jnp.where(off_ok, cosm, NEG_BIG)
    offmax = jnp.max(off, axis=1, keepdims=True)                # [TR, 1]
    offmax_ref[...] = offmax
    sumexp_ref[...] = jnp.sum(jnp.exp(S_SCALE * (off - offmax)),
                              axis=1, keepdims=True)            # masked cols underflow to 0


def _finalize_kernel(m_prev_ref, pos_ref, offmax_ref, sumexp_ref,
                     loss_ref, m_ema_ref, *, b_actual):
    """O(B) finalize: EMA margin + cross-entropy from the per-row stats."""
    pos = pos_ref[...]                                          # [Bp, 1]
    offmax = offmax_ref[...]                                    # [Bp, 1]
    sumexp = sumexp_ref[...]                                    # [Bp, 1]
    bp = pos.shape[0]
    inv_b = 1.0 / b_actual

    row_valid = lax.broadcasted_iota(jnp.int32, (bp, 1), 0) < b_actual

    # Margin: mean(pos - rowmax(clone with diag zeroed)) -> EMA with m_prev (SMEM scalar).
    neg = jnp.maximum(offmax, 0.0)                              # diag replaced by 0 in the ref
    m_batch = jnp.sum(jnp.where(row_valid, pos - neg, 0.0),
                      axis=0, keepdims=True) * inv_b            # (1, 1)
    m_ema = EMA_DECAY * m_batch + (1.0 - EMA_DECAY) * m_prev_ref[0, 0]

    # CrossEntropy(target = row index): only the diagonal logit carries the margin.
    tgt = S_SCALE * (pos - m_ema)                               # [Bp, 1]
    off_max_logit = S_SCALE * offmax
    row_max = jnp.maximum(off_max_logit, tgt)
    denom = sumexp * jnp.exp(off_max_logit - row_max) + jnp.exp(tgt - row_max)
    per_row = jnp.log(denom) + row_max - tgt                    # lse - target logit

    loss_ref[...] = jnp.sum(jnp.where(row_valid, per_row, 0.0),
                            axis=0, keepdims=True) * inv_b      # (1, 1)
    m_ema_ref[...] = m_ema


def contraface_loss(feature1, feature2, label, m_prev=0.0):
    """ContraFace forward.  feature1/feature2: [B, D], label: [B] int.

    Returns (loss, m_new) where m_new is the updated EMA buffer (self.m); feed
    it back as m_prev on the next step.  m_prev=0.0 reproduces the module's
    first forward exactly."""
    B, D = feature1.shape
    Bp, TR = _choose_tiles(B)
    Dp = _round_up(max(D, 128), 128)
    grid_n = Bp // TR

    # bf16 features on the wire; labels padded with -1 (never matched downstream).
    f1 = jnp.pad(feature1.astype(jnp.bfloat16), ((0, Bp - B), (0, Dp - D)))
    f2 = jnp.pad(feature2.astype(jnp.bfloat16), ((0, Bp - B), (0, Dp - D)))
    lab = jnp.pad(label.astype(jnp.int32), (0, Bp - B), constant_values=-1)
    lab_row = lab.reshape(Bp, 1)
    lab_col = lab.reshape(1, Bp)
    m_prev_arr = jnp.asarray(m_prev, dtype=jnp.float32).reshape(1, 1)

    # VMEM budget: double-buffered bf16 feature blocks + in-kernel f32/bf16
    # copies + [TR,Bp] f32 temporaries, clamped to the chip's real capacity.
    vmem_bytes = (
        2 * TR * Dp * 2            # f1 row tile (double-buffered, bf16)
        + 2 * Bp * Dp * 2          # resident f2 (pipeline still allocates 2 buffers)
        + Bp * Dp * (4 + 2)        # in-kernel f32 upcast + re-cast bf16 of f2
        + TR * Dp * (4 + 2)        # same for the f1 tile
        + 8 * TR * Bp * 4          # [TR,Bp] f32 temporaries headroom
        + 8 * Bp * 4               # label blocks / per-row outputs (generous)
        + (4 << 20)                # slack
    )
    vmem_bytes = int(min(max(vmem_bytes, 16 << 20),
                         _vmem_capacity_bytes() - (8 << 20)))

    cost = pl.CostEstimate(
        flops=2 * Bp * Bp * Dp + 10 * Bp * Bp + 6 * Bp * Dp * grid_n,
        transcendentals=Bp * Bp + (grid_n + 1) * Bp,
        bytes_accessed=2 * Bp * Dp * 2 + 2 * Bp * 4 + 3 * Bp * 4,
    )

    pos, offmax, sumexp = pl.pallas_call(
        functools.partial(_stats_kernel, b_actual=B),
        out_shape=(jax.ShapeDtypeStruct((Bp, 1), jnp.float32),
                   jax.ShapeDtypeStruct((Bp, 1), jnp.float32),
                   jax.ShapeDtypeStruct((Bp, 1), jnp.float32)),
        grid=(grid_n,),
        in_specs=[
            pl.BlockSpec((TR, Dp), lambda i: (i, 0)),   # f1 row tile
            pl.BlockSpec((Bp, Dp), lambda i: (0, 0)),   # f2, resident across tiles
            pl.BlockSpec((TR, 1), lambda i: (i, 0)),    # label rows
            pl.BlockSpec((1, Bp), lambda i: (0, 0)),    # label cols
        ],
        out_specs=(
            pl.BlockSpec((TR, 1), lambda i: (i, 0)),
            pl.BlockSpec((TR, 1), lambda i: (i, 0)),
            pl.BlockSpec((TR, 1), lambda i: (i, 0)),
        ),
        compiler_params=pltpu.CompilerParams(
            dimension_semantics=("parallel",),
            vmem_limit_bytes=vmem_bytes,
        ),
        cost_estimate=cost,
    )(f1, f2, lab_row, lab_col)

    loss, m_new = pl.pallas_call(
        functools.partial(_finalize_kernel, b_actual=B),
        out_shape=(jax.ShapeDtypeStruct((1, 1), jnp.float32),
                   jax.ShapeDtypeStruct((1, 1), jnp.float32)),
        in_specs=[
            pl.BlockSpec(memory_space=pltpu.SMEM),      # m_prev: runtime scalar, no retrace
            pl.BlockSpec(memory_space=pltpu.VMEM),
            pl.BlockSpec(memory_space=pltpu.VMEM),
            pl.BlockSpec(memory_space=pltpu.VMEM),
        ],
        out_specs=(
            pl.BlockSpec(memory_space=pltpu.VMEM),
            pl.BlockSpec(memory_space=pltpu.VMEM),
        ),
    )(m_prev_arr, pos, offmax, sumexp)

    return loss[0, 0], m_new[0, 0]


if __name__ == "__main__":
    # Small deterministic inputs consistent with the module's forward:
    # feature1/feature2: [B, D] embeddings, label: [B] int class ids (with dups).
    B, D = 8, 32
    key = jax.random.PRNGKey(0)
    k1, k2, k3 = jax.random.split(key, 3)
    feature1 = jax.random.normal(k1, (B, D), dtype=jnp.float32)
    feature2 = jax.random.normal(k2, (B, D), dtype=jnp.float32)
    label = jax.random.randint(k3, (B,), 0, 4, dtype=jnp.int32)  # duplicates likely

    loss, m_new = contraface_loss(feature1, feature2, label, m_prev=0.0)
    jax.block_until_ready((loss, m_new))
    assert loss.shape == () and jnp.isfinite(loss) and jnp.isfinite(m_new)
    print("KERNEL_OK")
</pallas_src>

<mosaic_0001>
module attributes {stable_mosaic.version = 11 : i64} {
  func.func @_stats_kernel(%arg0: i32, %arg1: memref<16x128xbf16, #tpu.memory_space<vmem>>, %arg2: memref<16x128xbf16, #tpu.memory_space<vmem>>, %arg3: memref<16x1xi32, #tpu.memory_space<vmem>>, %arg4: memref<1x16xi32, #tpu.memory_space<vmem>>, %arg5: memref<16x1xf32, #tpu.memory_space<vmem>>, %arg6: memref<16x1xf32, #tpu.memory_space<vmem>>, %arg7: memref<16x1xf32, #tpu.memory_space<vmem>>) attributes {dimension_semantics = [#tpu.dimension_semantics<parallel>], iteration_bounds = array<i64: 1>, scalar_prefetch = 0 : i64, scratch_operands = 0 : i64, tpu.core_type = #tpu.core_type<tc>, window_params = [{transform_indices = @transform_0, window_bounds = array<i64: 16, 128>}, {pipeline_mode = #tpu.pipeline_mode<synchronous>, transform_indices = @transform_1, window_bounds = array<i64: 16, 128>}, {transform_indices = @transform_2, window_bounds = array<i64: 16, 1>}, {pipeline_mode = #tpu.pipeline_mode<synchronous>, transform_indices = @transform_3, window_bounds = array<i64: 1, 16>}, {transform_indices = @transform_4, window_bounds = array<i64: 16, 1>}, {transform_indices = @transform_5, window_bounds = array<i64: 16, 1>}, {transform_indices = @transform_6, window_bounds = array<i64: 16, 1>}]} {
    %c0 = arith.constant 0 : index
    %c0_0 = arith.constant 0 : index
    %0 = vector.load %arg1[%c0, %c0_0] : memref<16x128xbf16, #tpu.memory_space<vmem>>, vector<16x128xbf16>
    %1 = arith.extf %0 : vector<16x128xbf16> to vector<16x128xf32>
    %c0_1 = arith.constant 0 : index
    %c0_2 = arith.constant 0 : index
    %2 = vector.load %arg2[%c0_1, %c0_2] : memref<16x128xbf16, #tpu.memory_space<vmem>>, vector<16x128xbf16>
    %3 = arith.extf %2 : vector<16x128xbf16> to vector<16x128xf32>
    %4 = arith.mulf %1, %1 : vector<16x128xf32>
    %cst = arith.constant dense<0.000000e+00> : vector<16xf32>
    %5 = vector.multi_reduction <add>, %4, %cst [1] : vector<16x128xf32> to vector<16xf32>
    %6 = vector.shape_cast %5 : vector<16xf32> to vector<16x1xf32>
    %cst_3 = arith.constant 9.99999996E-13 : f32
    %7 = vector.broadcast %cst_3 : f32 to vector<16x1xf32>
    %8 = arith.maximumf %6, %7 : vector<16x1xf32>
    %9 = math.rsqrt %8 : vector<16x1xf32>
    %10 = arith.mulf %3, %3 : vector<16x128xf32>
    %cst_4 = arith.constant dense<0.000000e+00> : vector<16xf32>
    %11 = vector.multi_reduction <add>, %10, %cst_4 [1] : vector<16x128xf32> to vector<16xf32>
    %12 = vector.shape_cast %11 : vector<16xf32> to vector<16x1xf32>
    %cst_5 = arith.constant 9.99999996E-13 : f32
    %13 = vector.broadcast %cst_5 : f32 to vector<16x1xf32>
    %14 = arith.maximumf %12, %13 : vector<16x1xf32>
    %15 = math.rsqrt %14 : vector<16x1xf32>
    %16 = vector.broadcast %9 : vector<16x1xf32> to vector<16x128xf32>
    %17 = arith.mulf %1, %16 : vector<16x128xf32>
    %18 = arith.truncf %17 : vector<16x128xf32> to vector<16x128xbf16>
    %19 = vector.broadcast %15 : vector<16x1xf32> to vector<16x128xf32>
    %20 = arith.mulf %3, %19 : vector<16x128xf32>
    %21 = arith.truncf %20 : vector<16x128xf32> to vector<16x128xbf16>
    %cst_6 = arith.constant dense<0.000000e+00> : vector<16x16xf32>
    %22 = tpu.matmul %18, %21, %cst_6 {dimension_numbers = #tpu.dot_dimension_numbers<[1], [1], [0], [0], [0, 0, 1, 0], [], []>} : vector<16x128xbf16>, vector<16x128xbf16>, vector<16x16xf32> -> vector<16x16xf32>
    %cst_7 = arith.constant -1.000000e+00 : f32
    %cst_8 = arith.constant 1.000000e+00 : f32
    %23 = vector.broadcast %cst_7 : f32 to vector<16x16xf32>
    %24 = arith.maximumf %23, %22 : vector<16x16xf32>
    %25 = vector.broadcast %cst_8 : f32 to vector<16x16xf32>
    %26 = arith.minimumf %25, %24 : vector<16x16xf32>
    %c16_i32 = arith.constant 16 : i32
    %27 = arith.muli %arg0, %c16_i32 : i32
    %28 = tpu.iota {dimensions = array<i32: 0>} : vector<16x1xi32>
    %29 = vector.broadcast %27 : i32 to vector<16x1xi32>
    %30 = arith.addi %29, %28 : vector<16x1xi32>
    %31 = tpu.iota {dimensions = array<i32: 1>} : vector<1x16xi32>
    %32 = vector.broadcast %30 : vector<16x1xi32> to vector<16x16xi32>
    %33 = vector.broadcast %31 : vector<1x16xi32> to vector<16x16xi32>
    %34 = arith.cmpi eq, %32, %33 : vector<16x16xi32>
    %c8_i32 = arith.constant 8 : i32
    %35 = vector.broadcast %c8_i32 : i32 to vector<1x16xi32>
    %36 = arith.cmpi slt, %31, %35 : vector<1x16xi32>
    %cst_9 = arith.constant dense<true> : vector<16x16xi1>
    %37 = arith.xori %34, %cst_9 : vector<16x16xi1>
    %38 = vector.broadcast %36 : vector<1x16xi1> to vector<16x16xi1>
    %39 = arith.andi %38, %37 : vector<16x16xi1>
    %c0_10 = arith.constant 0 : index
    %c0_11 = arith.constant 0 : index
    %40 = vector.load %arg3[%c0_10, %c0_11] : memref<16x1xi32, #tpu.memory_space<vmem>>, vector<16x1xi32>
    %c0_12 = arith.constant 0 : index
    %c0_13 = arith.constant 0 : index
    %41 = vector.load %arg4[%c0_12, %c0_13] : memref<1x16xi32, #tpu.memory_space<vmem>>, vector<1x16xi32>
    %42 = vector.broadcast %40 : vector<16x1xi32> to vector<16x16xi32>
    %43 = vector.broadcast %41 : vector<1x16xi32> to vector<16x16xi32>
    %44 = arith.cmpi eq, %42, %43 : vector<16x16xi32>
    %45 = arith.andi %44, %39 : vector<16x16xi1>
    %cst_14 = arith.constant 0.000000e+00 : f32
    %46 = vector.broadcast %cst_14 : f32 to vector<16x16xf32>
    %47 = arith.select %45, %46, %26 : vector<16x16xi1>, vector<16x16xf32>
    %cst_15 = arith.constant 0.000000e+00 : f32
    %48 = vector.broadcast %cst_15 : f32 to vector<16x16xf32>
    %49 = arith.select %34, %47, %48 : vector<16x16xi1>, vector<16x16xf32>
    %cst_16 = arith.constant dense<0.000000e+00> : vector<16xf32>
    %50 = vector.multi_reduction <add>, %49, %cst_16 [1] : vector<16x16xf32> to vector<16xf32>
    %51 = vector.shape_cast %50 : vector<16xf32> to vector<16x1xf32>
    %c0_17 = arith.constant 0 : index
    %c0_18 = arith.constant 0 : index
    %52 = vector.load %arg5[%c0_17, %c0_18] : memref<16x1xf32, #tpu.memory_space<vmem>>, vector<16x1xf32>
    tpu.vector_store %arg5[%c0_17, %c0_18], %51 {strides = array<i32>} : memref<16x1xf32, #tpu.memory_space<vmem>>, vector<16x1xf32>,
    %cst_19 = arith.constant -1.000000e+09 : f32
    %53 = vector.broadcast %cst_19 : f32 to vector<16x16xf32>
    %54 = arith.select %39, %47, %53 : vector<16x16xi1>, vector<16x16xf32>
    %cst_20 = arith.constant dense<0xFF800000> : vector<16xf32>
    %55 = vector.multi_reduction <maximumf>, %54, %cst_20 [1] : vector<16x16xf32> to vector<16xf32>
    %56 = vector.shape_cast %55 : vector<16xf32> to vector<16x1xf32>
    %c0_21 = arith.constant 0 : index
    %c0_22 = arith.constant 0 : index
    %57 = vector.load %arg6[%c0_21, %c0_22] : memref<16x1xf32, #tpu.memory_space<vmem>>, vector<16x1xf32>
    tpu.vector_store %arg6[%c0_21, %c0_22], %56 {strides = array<i32>} : memref<16x1xf32, #tpu.memory_space<vmem>>, vector<16x1xf32>,
    %58 = vector.broadcast %56 : vector<16x1xf32> to vector<16x16xf32>
    %59 = arith.subf %54, %58 : vector<16x16xf32>
    %cst_23 = arith.constant 6.400000e+01 : f32
    %60 = vector.broadcast %cst_23 : f32 to vector<16x16xf32>
    %61 = arith.mulf %60, %59 : vector<16x16xf32>
    %62 = math.exp %61 : vector<16x16xf32>
    %cst_24 = arith.constant dense<0.000000e+00> : vector<16xf32>
    %63 = vector.multi_reduction <add>, %62, %cst_24 [1] : vector<16x16xf32> to vector<16xf32>
    %64 = vector.shape_cast %63 : vector<16xf32> to vector<16x1xf32>
    %c0_25 = arith.constant 0 : index
    %c0_26 = arith.constant 0 : index
    %65 = vector.load %arg7[%c0_25, %c0_26] : memref<16x1xf32, #tpu.memory_space<vmem>>, vector<16x1xf32>
    tpu.vector_store %arg7[%c0_25, %c0_26], %64 {strides = array<i32>} : memref<16x1xf32, #tpu.memory_space<vmem>>, vector<16x1xf32>,
    return
  }
  func.func @transform_0(%arg0: i32) -> (i32, i32) {
    %c0_i32 = arith.constant 0 : i32
    %c0_i32_0 = arith.constant 0 : i32
    return %arg0, %c0_i32 : i32, i32
  }
  func.func @transform_1(%arg0: i32) -> (i32, i32) {
    %c0_i32 = arith.constant 0 : i32
    %c0_i32_0 = arith.constant 0 : i32
    %c0_i32_1 = arith.constant 0 : i32
    return %c0_i32, %c0_i32_0 : i32, i32
  }
  func.func @transform_2(%arg0: i32) -> (i32, i32) {
    %c0_i32 = arith.constant 0 : i32
    %c0_i32_0 = arith.constant 0 : i32
    return %arg0, %c0_i32 : i32, i32
  }
  func.func @transform_3(%arg0: i32) -> (i32, i32) {
    %c0_i32 = arith.constant 0 : i32
    %c0_i32_0 = arith.constant 0 : i32
    %c0_i32_1 = arith.constant 0 : i32
    return %c0_i32, %c0_i32_0 : i32, i32
  }
  func.func @transform_4(%arg0: i32) -> (i32, i32) {
    %c0_i32 = arith.constant 0 : i32
    %c0_i32_0 = arith.constant 0 : i32
    return %arg0, %c0_i32 : i32, i32
  }
  func.func @transform_5(%arg0: i32) -> (i32, i32) {
    %c0_i32 = arith.constant 0 : i32
    %c0_i32_0 = arith.constant 0 : i32
    return %arg0, %c0_i32 : i32, i32
  }
  func.func @transform_6(%arg0: i32) -> (i32, i32) {
    %c0_i32 = arith.constant 0 : i32
    %c0_i32_0 = arith.constant 0 : i32
    return %arg0, %c0_i32 : i32, i32
  }
}

</mosaic_0001>

<llo_original>
// kernel: tpu_custom_call.1
$region0: #{tpu_custom_call.1}
  #allocation0 [shape = 'u32[]', space=smem, size = 0x4, offset = 0x4, fixed_abs, tag = 'smem constant byte address 0x4 - core index']
  #allocation1 [shape = 'u32[144,128]{1,0:T(1,128)}', space=vmem, size = 0x12000, scoped, tag = 'internal scratch']
  %s0 = inlined_call_operand.vmem [shape: bf16[16,128], index: 0, kind: input, shape index: {}]
  %s1 = inlined_call_operand.vmem [shape: bf16[16,128], index: 1, kind: input, shape index: {}]
  %s2 = inlined_call_operand.vmem [shape: s32[16,1], index: 2, kind: input, shape index: {}]
  %s3 = inlined_call_operand.vmem [shape: s32[1,16], index: 3, kind: input, shape index: {}]
  %s4 = inlined_call_operand.vmem [shape: f32[16,1], index: 4, kind: output, shape index: {0}]
  %s5 = inlined_call_operand.vmem [shape: f32[16,1], index: 5, kind: output, shape index: {1}]
  %s6 = inlined_call_operand.vmem [shape: f32[16,1], index: 6, kind: output, shape index: {2}]
  %7 = xla_tuple %s4, %s5, %s6
  %s8 = sld [smem:[#allocation0]]
  $region42: #{tpu_custom_call.1} parent=0
    _
  %s10 = ssub.s32 1, %s8
  %s11 = scalar_select 0, %s10, %s8
  // Predicated region
  $region2: #{tpu_custom_call.1} parent=0 // pred_check
    _
  $region3: #{tpu_custom_call.1} parent=0 // pred_check_branch
    %13 = sbr.rel (0) target = $region5
  $region4: #{tpu_custom_call.1} parent=0 // pred_region
    _
  $region5: #{tpu_custom_call.1} parent=0 // pred_fallthru
    _
  // Predicated region
  $region6: #{tpu_custom_call.1} parent=0 // pred_check
    _
  $region7: #{tpu_custom_call.1} parent=0 // pred_check_branch
    %15 = sbr.rel (0) target = $region9
  $region8: #{tpu_custom_call.1} parent=0 // pred_region
    _
  $region9: #{tpu_custom_call.1} parent=0 // pred_fallthru
    _
  // Predicated region
  $region10: #{tpu_custom_call.1} parent=0 // pred_check
    _
  $region11: #{tpu_custom_call.1} parent=0 // pred_check_branch
    %17 = sbr.rel (0) target = $region13
  $region12: #{tpu_custom_call.1} parent=0 // pred_region
    _
  $region13: #{tpu_custom_call.1} parent=0 // pred_fallthru
    _
  // Predicated region
  $region14: #{tpu_custom_call.1} parent=0 // pred_check
    _
  $region15: #{tpu_custom_call.1} parent=0 // pred_check_branch
    %19 = sbr.rel (0) target = $region17
  $region16: #{tpu_custom_call.1} parent=0 // pred_region
    _
  $region17: #{tpu_custom_call.1} parent=0 // pred_fallthru
    _
  %v21 = vld [vmem:[%s0] sm:$0xf]
  %v22 = vld [vmem:[%s0 + $0x4] sm:$0xf]
  %v23 = vunpack.c.l.bf16 %v21
  %v24 = vunpack.c.l.bf16 %v22
  %v25 = vld [vmem:[%s1] sm:$0xf]
  %v26 = vld [vmem:[%s1 + $0x4] sm:$0xf]
  %v27 = vunpack.c.l.bf16 %v25
  %v28 = vunpack.c.l.bf16 %v26
  %v29 = vmul.f32 %v23, %v23
  %v30 = vmul.f32 %v24, %v24
  %31 = vadd.xlane.f32.xlu0 %v29
  %v32 = vpop.xlane.xlu0 %31
  %33 = vadd.xlane.f32.xlu0 %v30
  %v34 = vpop.xlane.xlu0 %33
  %v35 = vmax.f32 %v32, 1e-12
  %v36 = vmax.f32 %v34, 1e-12
  %v37 = vrsqrt.pop %v35
  %v38 = vrsqrt.pop %v36
  %v39 = vmul.f32 %v27, %v27
  %v40 = vmul.f32 %v28, %v28
  %41 = vadd.xlane.f32.xlu0 %v39
  %v42 = vpop.xlane.xlu0 %41
  %43 = vadd.xlane.f32.xlu0 %v40
  %v44 = vpop.xlane.xlu0 %43
  %v45 = vmax.f32 %v42, 1e-12
  %v46 = vmax.f32 %v44, 1e-12
  %v47 = vrsqrt.pop %v45
  %v48 = vrsqrt.pop %v46
  %v49 = vmul.f32 %v23, %v37
  %v50 = vmul.f32 %v24, %v38
  %v51 = vpack.c.bf16 %v50, %v49
  %v52 = vmul.f32 %v27, %v47
  %v53 = vmul.f32 %v28, %v48
  %v54 = vpack.c.bf16 %v53, %v52
  %55 = vmatprep.subr.bf16.mxu0 0
  %56 = vmatpush1.bf16.xpose.msra.mxu0 %v54
  %57 = vmatprep.subr.bf16.mxu0 0
  %58 = vmatpush1.bf16.xpose.msra.mxu0 0
  %59 = vmatprep.subr.bf16.mxu0 0
  %60 = vmatpush1.bf16.xpose.msra.mxu0 0
  %61 = vmatprep.subr.bf16.mxu0 0
  %62 = vmatpush1.bf16.xpose.msra.mxu0 0
  %63 = vmatprep.subr.bf16.mxu0 0
  %64 = vmatpush1.bf16.xpose.msra.mxu0 0
  %65 = vmatprep.subr.bf16.mxu0 0
  %66 = vmatpush1.bf16.xpose.msra.mxu0 0
  %67 = vmatprep.subr.bf16.mxu0 0
  %68 = vmatpush1.bf16.xpose.msra.mxu0 0
  %69 = vmatprep.subr.bf16.mxu0 0
  %70 = vmatpush1.bf16.xpose.msra.mxu0 0
  %71 = vmatprep.subr.bf16.mxu0 0
  %72 = vmatpush1.bf16.xpose.msra.mxu0 0
  %73 = vmatprep.subr.bf16.mxu0 0
  %74 = vmatpush1.bf16.xpose.msra.mxu0 0
  %75 = vmatprep.subr.bf16.mxu0 0
  %76 = vmatpush1.bf16.xpose.msra.mxu0 0
  %77 = vmatprep.subr.bf16.mxu0 0
  %78 = vmatpush1.bf16.xpose.msra.mxu0 0
  %79 = vmatprep.subr.bf16.mxu0 0
  %80 = vmatpush1.bf16.xpose.msra.mxu0 0
  %81 = vmatprep.subr.bf16.mxu0 0
  %82 = vmatpush1.bf16.xpose.msra.mxu0 0
  %83 = vmatprep.subr.bf16.mxu0 0
  %84 = vmatpush1.bf16.xpose.msra.mxu0 0
  %85 = vmatprep.subr.bf16.mxu0 0
  %86 = vmatpush1.bf16.xpose.msra.mxu0 0
  %87 = vmatprep.mubr.bf16.mxu0 0
  %88 = vmatmul.mubr.bf16.gmra.mrb[0].mxu0 %v51
  %v89 = vpop.f32.mrb[0].mxu0
  %v90 = vadd.f32 0.0, %v89
  %v91 = vpop.f32.mrb[0].mxu0
  %v92 = vpop.f32.mrb[0].mxu0
  %v93 = vadd.f32 0.0, %v92
  %v94 = vpop.f32.mrb[0].mxu0
  %95 = vdwg.mxu0
  %v96 = vmax.f32 %v90, -1.0
  %v97 = vmax.f32 %v93, -1.0
  %v98 = vmin.f32 %v96, 1.0
  %v99 = vmin.f32 %v97, 1.0
  %s100 = smul.u32 0, 16
  %v101 = vlaneseq
  %v102 = vshrl.u32 %v101, 7
  %v103 = vadd.s32 %v102, 8
  %v104 = vstv %s100
  %v105 = vadd.s32 %v104, %v102
  %v106 = vadd.s32 %v104, %v103
  %v107 = vlaneseq
  %v108 = vand.u32 %v107, 127
  %vm109 = vcmp.eq.s32.totalorder %v105, %v108
  %vm110 = vcmp.eq.s32.totalorder %v106, %v108
  %vm111 = vcmp.lt.s32.totalorder %v108, 8
  %vm112 = vmxor %vm109, 1
  %vm113 = vmxor %vm110, 1
  %v114 = vsel %vm111, 1, 0
  %vm115 = vcmp.eq.s32.totalorder %v114, 1
  %vm116 = vmand %vm115, %vm112
  %vm117 = vmand %vm115, %vm113
  %v118 = vld [vmem:[%s2] sm:$0xff]
  %v119 = vld [vmem:[%s2 + $0x8] sm:$0xff]
  %v120 = vld [vmem:[%s3] sm:$0x1]
  %121 = vset.pattern.permute.xlu0 0
  %122 = vperm.xlu0 %121, %v118
  %v123 = vpop.permute.xlu0 %122
  %124 = vset.pattern.permute.xlu0 0
  %125 = vperm.xlu0 %124, %v119
  %v126 = vpop.permute.xlu0 %125
  %v127 = vlaneseq
  %v128 = vshrl.u32 %v127, 7
  %v129 = vsub.s32 0, %v128
  %v130 = vrot.slane %v120, %v129
  %vm131 = vcmp.eq.s32.totalorder %v123, %v130
  %vm132 = vcmp.eq.s32.totalorder %v126, %v130
  %vm133 = vmand %vm131, %vm116
  %vm134 = vmand %vm132, %vm117
  %v135 = vsel %vm133, 0.0, %v98
  %v136 = vsel %vm134, 0.0, %v99
  %v137 = vsel %vm109, %v135, 0.0
  %v138 = vsel %vm110, %v136, 0.0
  %vm139 = vcmask 130048
  %v140 = vsel %vm139, %v137, 0.0
  %141 = vadd.xlane.f32.xlu0 %v140
  %v142 = vpop.xlane.xlu0 %141
  %v143 = vsel %vm139, %v138, 0.0
  %144 = vadd.xlane.f32.xlu0 %v143
  %v145 = vpop.xlane.xlu0 %144
  %vm146 = vcmask 7168
  %147 = vst.msk [vmem:[%s4] sm:$0xff] %vm146, %v142
  %148 = vst.msk [vmem:[%s4 + $0x8] sm:$0xff] %vm146, %v145
  %v149 = vsel %vm116, %v135, -1e+09
  %v150 = vsel %vm117, %v136, -1e+09
  %v151 = vsel %vm139, %v149, -inf
  %152 = vmax.xlane.f32.xlu0 %v151
  %v153 = vpop.xlane.xlu0 %152
  %v154 = vsel %vm139, %v150, -inf
  %155 = vmax.xlane.f32.xlu0 %v154
  %v156 = vpop.xlane.xlu0 %155
  %157 = vst.msk [vmem:[%s5] sm:$0xff] %vm146, %v153
  %158 = vst.msk [vmem:[%s5 + $0x8] sm:$0xff] %vm146, %v156
  %v159 = vsub.f32 %v149, %v153
  %v160 = vsub.f32 %v150, %v156
  %v161 = vmul.f32 %v159, 64.0
  %v162 = vmul.f32 %v160, 64.0
  %v163 = vmul.f32 %v161, 1.442695
  %v164 = vpow.pop %v163
  %v165 = vmul.f32 %v162, 1.442695
  %v166 = vpow.pop %v165
  %v167 = vsel %vm139, %v164, 0.0
  %168 = vadd.xlane.f32.xlu0 %v167
  %v169 = vpop.xlane.xlu0 %168
  %v170 = vsel %vm139, %v166, 0.0
  %171 = vadd.xlane.f32.xlu0 %v170
  %v172 = vpop.xlane.xlu0 %171
  %173 = vst.msk [vmem:[%s6] sm:$0xff] %vm146, %v169
  %174 = vst.msk [vmem:[%s6 + $0x8] sm:$0xff] %vm146, %v172
  // Predicated region
  $region18: #{tpu_custom_call.1} parent=0 // pred_check
    _
  $region19: #{tpu_custom_call.1} parent=0 // pred_check_branch
    %176 = sbr.rel (0) target = $region21
  $region20: #{tpu_custom_call.1} parent=0 // pred_region
    _
  $region21: #{tpu_custom_call.1} parent=0 // pred_fallthru
    _
  // Predicated region
  $region22: #{tpu_custom_call.1} parent=0 // pred_check
    _
  $region23: #{tpu_custom_call.1} parent=0 // pred_check_branch
    %178 = sbr.rel (0) target = $region25
  $region24: #{tpu_custom_call.1} parent=0 // pred_region
    _
  $region25: #{tpu_custom_call.1} parent=0 // pred_fallthru
    _
  // Predicated region
  $region26: #{tpu_custom_call.1} parent=0 // pred_check
    _
  $region27: #{tpu_custom_call.1} parent=0 // pred_check_branch
    %180 = sbr.rel (0) target = $region29
  $region28: #{tpu_custom_call.1} parent=0 // pred_region
    _
  $region29: #{tpu_custom_call.1} parent=0 // pred_fallthru
    _
  // Predicated region
  $region30: #{tpu_custom_call.1} parent=0 // pred_check
    _
  $region31: #{tpu_custom_call.1} parent=0 // pred_check_branch
    %182 = sbr.rel (0) target = $region33
  $region32: #{tpu_custom_call.1} parent=0 // pred_region
    _
  $region33: #{tpu_custom_call.1} parent=0 // pred_fallthru
    _
  // Predicated region
  $region34: #{tpu_custom_call.1} parent=0 // pred_check
    _
  $region35: #{tpu_custom_call.1} parent=0 // pred_check_branch
    %184 = sbr.rel (0) target = $region37
  $region36: #{tpu_custom_call.1} parent=0 // pred_region
    _
  $region37: #{tpu_custom_call.1} parent=0 // pred_fallthru
    _
  // Predicated region
  $region38: #{tpu_custom_call.1} parent=0 // pred_check
    _
  $region39: #{tpu_custom_call.1} parent=0 // pred_check_branch
    %186 = sbr.rel (0) target = $region41
  $region40: #{tpu_custom_call.1} parent=0 // pred_region
    _
  $region41: #{tpu_custom_call.1} parent=0 // pred_fallthru
    _

</llo_original>
